<compile_context>
chip_gen: v6e
topology: v6e:2x2x1
jax: 0.10.0
libtpu: 0.0.40
codegen_flags: <defaults>
</compile_context>

<pallas_src>
import jax
import jax.numpy as jnp
from jax.experimental import pallas as pl
from jax.experimental.pallas import tpu as pltpu


def _round_up(x: int, m: int) -> int:
    return ((x + m - 1) // m) * m


def fusion_kernel(xv_ref, xq_ref, wv_ref, wq_ref, o_ref):
    # xv_ref: (TM, Dv)   visual rows (flattened batch*seq tile)
    # xq_ref: (TM, Dm)   question rows (already broadcast over the seq axis)
    # wv_ref: (Dv, Dmp)  visual weight, pre-transposed + lane-padded
    # wq_ref: (Dm, Dmp)  question weight, pre-transposed + lane-padded
    # o_ref:  (TM, Dmp)  fused output tile (lane-dense)
    vf = jnp.dot(xv_ref[...], wv_ref[...], preferred_element_type=jnp.float32)
    qf = jnp.dot(xq_ref[...], wq_ref[...], preferred_element_type=jnp.float32)
    joint = vf * qf
    # ELU(alpha=1): x if x > 0 else exp(x) - 1  (exp goes to the EUP slot)
    act = jnp.where(joint > 0, joint, jnp.exp(joint) - 1.0)
    o_ref[...] = act.astype(o_ref.dtype)


def fusion_forward(visual_feature, question_feature, w_visual, w_question,
                   *, row_tile=512):
    """Fusion.forward with the default config (use_bias/concat/with_score=False).

    visual_feature:   (B, N, visual_dim)
    question_feature: (B, module_dim) or (B, N, module_dim)
    w_visual:         (module_dim, visual_dim)   [PyTorch nn.Linear layout]
    w_question:       (module_dim, module_dim)
    returns:          (B, N, module_dim)
    """
    B, N, Dv = visual_feature.shape
    Dm = w_visual.shape[0]

    # Broadcast question features over the sequence axis (matches unsqueeze+repeat).
    if question_feature.ndim != visual_feature.ndim:
        question_feature = jnp.broadcast_to(
            question_feature[:, None, :], (B, N, Dm))

    # Flatten (B, N) -> M rows: one big matmul stream instead of per-batch steps.
    M = B * N
    xv = visual_feature.reshape(M, Dv)
    xq = question_feature.reshape(M, Dm)

    # Lane-dense output: pad module_dim up to a multiple of 128 (zeros in the
    # padded weight columns -> ELU(0)=0 there; sliced off below).
    Dmp = _round_up(Dm, 128)
    wv_t = jnp.pad(w_visual.T, ((0, 0), (0, Dmp - Dm)))
    wq_t = jnp.pad(w_question.T, ((0, 0), (0, Dmp - Dm)))

    # Row tile: multiple of 8 sublanes, capped so double-buffered tiles stay
    # small even on v7x's 64 MiB VMEM.
    tm = min(row_tile, _round_up(M, 8))
    Mp = _round_up(M, tm)
    if Mp != M:
        xv = jnp.pad(xv, ((0, Mp - M), (0, 0)))
        xq = jnp.pad(xq, ((0, Mp - M), (0, 0)))

    grid = (Mp // tm,)

    flops = 2 * Mp * Dv * Dmp + 2 * Mp * Dm * Dmp + 2 * Mp * Dmp
    bytes_accessed = 4 * (Mp * Dv + Mp * Dm + Dv * Dmp + Dm * Dmp + Mp * Dmp)
    cost = pl.CostEstimate(flops=flops, transcendentals=Mp * Dmp,
                           bytes_accessed=bytes_accessed)

    out_padded = pl.pallas_call(
        fusion_kernel,
        out_shape=jax.ShapeDtypeStruct((Mp, Dmp), visual_feature.dtype),
        grid_spec=pltpu.PrefetchScalarGridSpec(
            num_scalar_prefetch=0,
            grid=grid,
            in_specs=[
                pl.BlockSpec((tm, Dv), lambda i: (i, 0)),
                pl.BlockSpec((tm, Dm), lambda i: (i, 0)),
                pl.BlockSpec((Dv, Dmp), lambda i: (0, 0)),
                pl.BlockSpec((Dm, Dmp), lambda i: (0, 0)),
            ],
            out_specs=pl.BlockSpec((tm, Dmp), lambda i: (i, 0)),
        ),
        compiler_params=pltpu.CompilerParams(
            dimension_semantics=("parallel",),   # row tiles are independent
            vmem_limit_bytes=64 * 1024 * 1024,
        ),
        cost_estimate=cost,
    )(xv, xq, wv_t, wq_t)

    # TODO(synk): dropout is identity at inference; the use_bias / concat /
    # with_score branches (all False in the default Fusion config) are not
    # implemented in-kernel.
    return out_padded[:M, :Dm].reshape(B, N, Dm)


if __name__ == "__main__":
    key = jax.random.PRNGKey(0)
    k_v, k_q, k_wv, k_wq = jax.random.split(key, 4)

    B, N = 2, 8
    visual_dim, module_dim = 64, 32

    visual = jax.random.normal(k_v, (B, N, visual_dim), dtype=jnp.float32)
    # 2-D question features exercise the unsqueeze+repeat broadcast path.
    question = jax.random.normal(k_q, (B, module_dim), dtype=jnp.float32)

    # Deterministic nn.Linear-style init (uniform with 1/sqrt(fan_in) bound).
    bound_v = 1.0 / (visual_dim ** 0.5)
    w_visual = jax.random.uniform(k_wv, (module_dim, visual_dim),
                                  dtype=jnp.float32,
                                  minval=-bound_v, maxval=bound_v)
    bound_q = 1.0 / (module_dim ** 0.5)
    w_question = jax.random.uniform(k_wq, (module_dim, module_dim),
                                    dtype=jnp.float32,
                                    minval=-bound_q, maxval=bound_q)

    out = fusion_forward(visual, question, w_visual, w_question)
    jax.block_until_ready(out)

    # Plain-JAX reference (matches the PyTorch forward at inference).
    q_b = jnp.broadcast_to(question[:, None, :], (B, N, module_dim))
    vf = visual @ w_visual.T
    qf = q_b @ w_question.T
    ref = jax.nn.elu(vf * qf)

    assert out.shape == (B, N, module_dim)
    assert jnp.allclose(out, ref, atol=1e-4, rtol=1e-4)

    print("KERNEL_OK")
</pallas_src>

<mosaic_0001>
module attributes {stable_mosaic.version = 11 : i64} {
  func.func @fusion_kernel(%arg0: i32, %arg1: memref<16x64xf32, #tpu.memory_space<vmem>>, %arg2: memref<16x32xf32, #tpu.memory_space<vmem>>, %arg3: memref<64x128xf32, #tpu.memory_space<vmem>>, %arg4: memref<32x128xf32, #tpu.memory_space<vmem>>, %arg5: memref<16x128xf32, #tpu.memory_space<vmem>>) attributes {dimension_semantics = [#tpu.dimension_semantics<parallel>], iteration_bounds = array<i64: 1>, scalar_prefetch = 0 : i64, scratch_operands = 0 : i64, tpu.core_type = #tpu.core_type<tc>, window_params = [{transform_indices = @transform_0, window_bounds = array<i64: 16, 64>}, {transform_indices = @transform_1, window_bounds = array<i64: 16, 32>}, {pipeline_mode = #tpu.pipeline_mode<synchronous>, transform_indices = @transform_2, window_bounds = array<i64: 64, 128>}, {pipeline_mode = #tpu.pipeline_mode<synchronous>, transform_indices = @transform_3, window_bounds = array<i64: 32, 128>}, {transform_indices = @transform_4, window_bounds = array<i64: 16, 128>}]} {
    %c0 = arith.constant 0 : index
    %c0_0 = arith.constant 0 : index
    %0 = vector.load %arg1[%c0, %c0_0] : memref<16x64xf32, #tpu.memory_space<vmem>>, vector<16x64xf32>
    %c0_1 = arith.constant 0 : index
    %c0_2 = arith.constant 0 : index
    %1 = vector.load %arg3[%c0_1, %c0_2] : memref<64x128xf32, #tpu.memory_space<vmem>>, vector<64x128xf32>
    %cst = arith.constant dense<0.000000e+00> : vector<16x128xf32>
    %2 = tpu.matmul %0, %1, %cst {dimension_numbers = #tpu.dot_dimension_numbers<[1], [0], [0], [1], [0, 0, 1, 1], [], []>} : vector<16x64xf32>, vector<64x128xf32>, vector<16x128xf32> -> vector<16x128xf32>
    %c0_3 = arith.constant 0 : index
    %c0_4 = arith.constant 0 : index
    %3 = vector.load %arg2[%c0_3, %c0_4] : memref<16x32xf32, #tpu.memory_space<vmem>>, vector<16x32xf32>
    %c0_5 = arith.constant 0 : index
    %c0_6 = arith.constant 0 : index
    %4 = vector.load %arg4[%c0_5, %c0_6] : memref<32x128xf32, #tpu.memory_space<vmem>>, vector<32x128xf32>
    %cst_7 = arith.constant dense<0.000000e+00> : vector<16x128xf32>
    %5 = tpu.matmul %3, %4, %cst_7 {dimension_numbers = #tpu.dot_dimension_numbers<[1], [0], [0], [1], [0, 0, 1, 1], [], []>} : vector<16x32xf32>, vector<32x128xf32>, vector<16x128xf32> -> vector<16x128xf32>
    %6 = arith.mulf %2, %5 : vector<16x128xf32>
    %cst_8 = arith.constant 0.000000e+00 : f32
    %7 = vector.broadcast %cst_8 : f32 to vector<16x128xf32>
    %8 = arith.cmpf ogt, %6, %7 : vector<16x128xf32>
    %9 = math.exp %6 : vector<16x128xf32>
    %cst_9 = arith.constant 1.000000e+00 : f32
    %10 = vector.broadcast %cst_9 : f32 to vector<16x128xf32>
    %11 = arith.subf %9, %10 : vector<16x128xf32>
    %12 = arith.select %8, %6, %11 : vector<16x128xi1>, vector<16x128xf32>
    %c0_10 = arith.constant 0 : index
    %c0_11 = arith.constant 0 : index
    %13 = vector.load %arg5[%c0_10, %c0_11] : memref<16x128xf32, #tpu.memory_space<vmem>>, vector<16x128xf32>
    tpu.vector_store %arg5[%c0_10, %c0_11], %12 {strides = array<i32>} : memref<16x128xf32, #tpu.memory_space<vmem>>, vector<16x128xf32>,
    return
  }
  func.func @transform_0(%arg0: i32) -> (i32, i32) {
    %c0_i32 = arith.constant 0 : i32
    %c0_i32_0 = arith.constant 0 : i32
    return %arg0, %c0_i32 : i32, i32
  }
  func.func @transform_1(%arg0: i32) -> (i32, i32) {
    %c0_i32 = arith.constant 0 : i32
    %c0_i32_0 = arith.constant 0 : i32
    return %arg0, %c0_i32 : i32, i32
  }
  func.func @transform_2(%arg0: i32) -> (i32, i32) {
    %c0_i32 = arith.constant 0 : i32
    %c0_i32_0 = arith.constant 0 : i32
    %c0_i32_1 = arith.constant 0 : i32
    return %c0_i32, %c0_i32_0 : i32, i32
  }
  func.func @transform_3(%arg0: i32) -> (i32, i32) {
    %c0_i32 = arith.constant 0 : i32
    %c0_i32_0 = arith.constant 0 : i32
    %c0_i32_1 = arith.constant 0 : i32
    return %c0_i32, %c0_i32_0 : i32, i32
  }
  func.func @transform_4(%arg0: i32) -> (i32, i32) {
    %c0_i32 = arith.constant 0 : i32
    %c0_i32_0 = arith.constant 0 : i32
    return %arg0, %c0_i32 : i32, i32
  }
}

</mosaic_0001>

<llo_original>
// kernel: tpu_custom_call.1
$region0: #{tpu_custom_call.1}
  #allocation0 [shape = 'u32[]', space=smem, size = 0x4, offset = 0x4, fixed_abs, tag = 'smem constant byte address 0x4 - core index']
  #allocation1 [shape = 'u32[144,128]{1,0:T(1,128)}', space=vmem, size = 0x12000, scoped, tag = 'internal scratch']
  %s0 = inlined_call_operand.hbm [shape: f32[16,64], index: 0, kind: input, shape index: {}]
  %s1 = inlined_call_operand.hbm [shape: f32[16,32], index: 1, kind: input, shape index: {}]
  %s2 = inlined_call_operand.hbm [shape: f32[64,128], index: 2, kind: input, shape index: {}]
  %s3 = inlined_call_operand.hbm [shape: f32[32,128], index: 3, kind: input, shape index: {}]
  %s4 = inlined_call_operand.hbm [shape: f32[16,128], index: 4, kind: output, shape index: {}]
  %s5 = sld [smem:[#allocation0]]
  $region42: #{tpu_custom_call.1} parent=0
    _
  %s7 = ssub.s32 1, %s5
  %s8 = scalar_select 0, %s7, %s5
  $region1: #{tpu_custom_call.1} parent=0
    #allocation2 [shape = 'u8[8192]{0}', space=vmem, size = 0x2000, scoped, tag = 'input window, operand 0, single buffered']
    #allocation3 [shape = 's32[1]{0}', space=sflag, size = 0x4, scoped, tag = 'scoped memory for tpu_custom_call.1']
    #allocation4 [shape = 's32[1]{0}', space=sflag, size = 0x4, scoped, tag = 'scoped memory for tpu_custom_call.1']
    #allocation5 [shape = 'u8[8192]{0}', space=vmem, size = 0x2000, scoped, tag = 'input window, operand 1, single buffered']
    #allocation6 [shape = 's32[1]{0}', space=sflag, size = 0x4, scoped, tag = 'scoped memory for tpu_custom_call.1']
    #allocation7 [shape = 'u8[32768]{0}', space=vmem, size = 0x8000, scoped, tag = 'input window, operand 2, single buffered']
    #allocation8 [shape = 'u8[16384]{0}', space=vmem, size = 0x4000, scoped, tag = 'input window, operand 3, single buffered']
    #allocation9 [shape = 's32[1]{0}', space=sflag, size = 0x4, scoped, tag = 'scoped memory for tpu_custom_call.1']
    #allocation10 [shape = 'u8[8192]{0}', space=vmem, size = 0x2000, scoped, tag = 'output window, operand 0, single buffered']
    %9 = vsyncpa [#allocation3], 0
    %10 = vsyncpa [#allocation6], 0
    %11 = vsyncpa [#allocation9], 0
    %12 = vsyncpa [#allocation4], 0
    // Predicated region
    $region2: #{tpu_custom_call.1} parent=1 // pred_check
      _
    $region3: #{tpu_custom_call.1} parent=1 // pred_check_branch
      %14 = sbr.rel (0) target = $region5
    $region4: #{tpu_custom_call.1} parent=1 // pred_region
      %s16 = ssub.s32 256, 256
      %17 = vsyncadd [#allocation3], %s16
      %s18 = sshll.u32 [#allocation2], 4
      %s19 = int_to_ptr.vmem [resolvable:$true] %s18
      %24 = dma.hbm_to_vmem [thread:$0]  %s0, 256, %s19, [#allocation3], 128, 128, 8
    $region5: #{tpu_custom_call.1} parent=1 // pred_fallthru
      _
    // Predicated region
    $region6: #{tpu_custom_call.1} parent=1 // pred_check
      _
    $region7: #{tpu_custom_call.1} parent=1 // pred_check_branch
      %26 = sbr.rel (0) target = $region9
    $region8: #{tpu_custom_call.1} parent=1 // pred_region
      %s28 = ssub.s32 256, 256
      %29 = vsyncadd [#allocation6], %s28
      %s30 = sshll.u32 [#allocation5], 4
      %s31 = int_to_ptr.vmem [resolvable:$true] %s30
      %36 = dma.hbm_to_vmem [thread:$0]  %s1, 256, %s31, [#allocation6], 128, 128, 8
    $region9: #{tpu_custom_call.1} parent=1 // pred_fallthru
      _
    // Predicated region
    $region10: #{tpu_custom_call.1} parent=1 // pred_check
      _
    $region11: #{tpu_custom_call.1} parent=1 // pred_check_branch
      %38 = sbr.rel (0) target = $region13
    $region12: #{tpu_custom_call.1} parent=1 // pred_region
      %s40 = ssub.s32 1024, 1024
      %41 = vsyncadd [#allocation6], %s40
      %s42 = sshll.u32 [#allocation7], 4
      %s43 = int_to_ptr.vmem [resolvable:$true] %s42
      %48 = dma.hbm_to_vmem [thread:$0]  %s2, 1024, %s43, [#allocation6], 128, 128, 8
    $region13: #{tpu_custom_call.1} parent=1 // pred_fallthru
      _
    // Predicated region
    $region14: #{tpu_custom_call.1} parent=1 // pred_check
      _
    $region15: #{tpu_custom_call.1} parent=1 // pred_check_branch
      %50 = sbr.rel (0) target = $region17
    $region16: #{tpu_custom_call.1} parent=1 // pred_region
      %s52 = ssub.s32 512, 512
      %53 = vsyncadd [#allocation9], %s52
      %s54 = sshll.u32 [#allocation8], 4
      %s55 = int_to_ptr.vmem [resolvable:$true] %s54
      %60 = dma.hbm_to_vmem [thread:$0]  %s3, 512, %s55, [#allocation9], 128, 128, 8
    $region17: #{tpu_custom_call.1} parent=1 // pred_fallthru
      _
    // Predicated region
    $region18: #{tpu_custom_call.1} parent=1 // pred_check
      _
    $region19: #{tpu_custom_call.1} parent=1 // pred_check_branch
      %62 = sbr.rel (0) target = $region21
    $region20: #{tpu_custom_call.1} parent=1 // pred_region
      %63 = dma.done [#allocation3], 256
    $region21: #{tpu_custom_call.1} parent=1 // pred_fallthru
      _
    // Predicated region
    $region22: #{tpu_custom_call.1} parent=1 // pred_check
      _
    $region23: #{tpu_custom_call.1} parent=1 // pred_check_branch
      %65 = sbr.rel (0) target = $region25
    $region24: #{tpu_custom_call.1} parent=1 // pred_region
      %66 = dma.done [#allocation6], 256
    $region25: #{tpu_custom_call.1} parent=1 // pred_fallthru
      _
    // Predicated region
    $region26: #{tpu_custom_call.1} parent=1 // pred_check
      _
    $region27: #{tpu_custom_call.1} parent=1 // pred_check_branch
      %68 = sbr.rel (0) target = $region29
    $region28: #{tpu_custom_call.1} parent=1 // pred_region
      %69 = dma.done [#allocation6], 1024
    $region29: #{tpu_custom_call.1} parent=1 // pred_fallthru
      _
    // Predicated region
    $region30: #{tpu_custom_call.1} parent=1 // pred_check
      _
    $region31: #{tpu_custom_call.1} parent=1 // pred_check_branch
      %71 = sbr.rel (0) target = $region33
    $region32: #{tpu_custom_call.1} parent=1 // pred_region
      %72 = dma.done [#allocation9], 512
    $region33: #{tpu_custom_call.1} parent=1 // pred_fallthru
      _
    %v73 = vld [vmem:[#allocation2] sm:$0xff]
    %v74 = vld [vmem:[#allocation2 + $0x8] sm:$0xff]
    %v75 = vld [vmem:[#allocation7] sm:$0xff]
    %v76 = vld [vmem:[#allocation7 + $0x8] sm:$0xff]
    %v77 = vld [vmem:[#allocation7 + $0x10] sm:$0xff]
    %v78 = vld [vmem:[#allocation7 + $0x18] sm:$0xff]
    %v79 = vld [vmem:[#allocation7 + $0x20] sm:$0xff]
    %v80 = vld [vmem:[#allocation7 + $0x28] sm:$0xff]
    %v81 = vld [vmem:[#allocation7 + $0x30] sm:$0xff]
    %v82 = vld [vmem:[#allocation7 + $0x38] sm:$0xff]
    %vm83 = vcmask 523264
    %v85 = vsel %vm83, %v73, 0
    %v88 = vsel %vm83, %v74, 0
    %90 = vmatprep.subr.mxu0 0.0
    %91 = vmatpush1.msra.mxu0 0.0
    %92 = vmatprep.subr.mxu0 0.0
    %93 = vmatpush1.msra.mxu0 0.0
    %94 = vmatprep.subr.mxu0 0.0
    %95 = vmatpush1.msra.mxu0 0.0
    %96 = vmatprep.subr.mxu0 0.0
    %97 = vmatpush1.msra.mxu0 0.0
    %98 = vmatprep.subr.mxu0 0.0
    %99 = vmatpush1.msra.mxu0 0.0
    %100 = vmatprep.subr.mxu0 0.0
    %101 = vmatpush1.msra.mxu0 0.0
    %102 = vmatprep.subr.mxu0 0.0
    %103 = vmatpush1.msra.mxu0 0.0
    %104 = vmatprep.subr.mxu0 0.0
    %105 = vmatpush1.msra.mxu0 0.0
    %106 = vmatprep.subr.mxu0 0.0
    %107 = vmatpush1.msra.mxu0 %v82
    %108 = vmatprep.subr.mxu0 0.0
    %109 = vmatpush1.msra.mxu0 %v81
    %110 = vmatprep.subr.mxu0 0.0
    %111 = vmatpush1.msra.mxu0 %v80
    %112 = vmatprep.subr.mxu0 0.0
    %113 = vmatpush1.msra.mxu0 %v79
    %114 = vmatprep.subr.mxu0 0.0
    %115 = vmatpush1.msra.mxu0 %v78
    %116 = vmatprep.subr.mxu0 0.0
    %117 = vmatpush1.msra.mxu0 %v77
    %118 = vmatprep.subr.mxu0 0.0
    %119 = vmatpush1.msra.mxu0 %v76
    %120 = vmatprep.subr.mxu0 0.0
    %121 = vmatpush1.msra.mxu0 %v75
    %122 = vmatprep.subr.mxu0 0.0
    %123 = vmatpush2.msra.mxu0 0.0
    %124 = vmatprep.subr.mxu0 0.0
    %125 = vmatpush2.msra.mxu0 0.0
    %126 = vmatprep.subr.mxu0 0.0
    %127 = vmatpush2.msra.mxu0 0.0
    %128 = vmatprep.subr.mxu0 0.0
    %129 = vmatpush2.msra.mxu0 0.0
    %130 = vmatprep.subr.mxu0 0.0
    %131 = vmatpush2.msra.mxu0 0.0
    %132 = vmatprep.subr.mxu0 0.0
    %133 = vmatpush2.msra.mxu0 0.0
    %134 = vmatprep.subr.mxu0 0.0
    %135 = vmatpush2.msra.mxu0 0.0
    %136 = vmatprep.subr.mxu0 0.0
    %137 = vmatpush2.msra.mxu0 0.0
    %138 = vmatprep.subr.mxu0 0.0
    %139 = vmatpush2.msra.mxu0 0.0
    %140 = vmatprep.subr.mxu0 0.0
    %141 = vmatpush2.msra.mxu0 0.0
    %142 = vmatprep.subr.mxu0 0.0
    %143 = vmatpush2.msra.mxu0 0.0
    %144 = vmatprep.subr.mxu0 0.0
    %145 = vmatpush2.msra.mxu0 0.0
    %146 = vmatprep.subr.mxu0 0.0
    %147 = vmatpush2.msra.mxu0 0.0
    %148 = vmatprep.subr.mxu0 0.0
    %149 = vmatpush2.msra.mxu0 0.0
    %150 = vmatprep.subr.mxu0 0.0
    %151 = vmatpush2.msra.mxu0 0.0
    %152 = vmatprep.subr.mxu0 0.0
    %153 = vmatpush2.msra.mxu0 0.0
    %154 = vmatprep.mubr.f32.mxu0 0.0
    %155 = vmatmul.mubr.f32.gmra.mxu0 %v85
    %v156 = vpop.f32.mrf.mxu0
    %v157 = vadd.f32 0.0, %v156
    %v158 = vpop.f32.mrf.mxu0
    %159 = vmatprep.mubr.f32.mxu0 0.0
    %160 = vmatmul.mubr.f32.gmra.mxu0 %v88
    %v161 = vpop.f32.mrf.mxu0
    %v162 = vadd.f32 0.0, %v161
    %v163 = vpop.f32.mrf.mxu0
    %164 = vdwg.mxu0
    %v165 = vld [vmem:[#allocation5] sm:$0xff]
    %v166 = vld [vmem:[#allocation5 + $0x8] sm:$0xff]
    %v167 = vld [vmem:[#allocation8] sm:$0xff]
    %v168 = vld [vmem:[#allocation8 + $0x8] sm:$0xff]
    %v169 = vld [vmem:[#allocation8 + $0x10] sm:$0xff]
    %v170 = vld [vmem:[#allocation8 + $0x18] sm:$0xff]
    %vm171 = vcmask 261120
    %v173 = vsel %vm171, %v165, 0
    %v176 = vsel %vm171, %v166, 0
    %178 = vmatprep.subr.mxu0 0.0
    %179 = vmatpush1.msra.mxu0 0.0
    %180 = vmatprep.subr.mxu0 0.0
    %181 = vmatpush1.msra.mxu0 0.0
    %182 = vmatprep.subr.mxu0 0.0
    %183 = vmatpush1.msra.mxu0 0.0
    %184 = vmatprep.subr.mxu0 0.0
    %185 = vmatpush1.msra.mxu0 0.0
    %186 = vmatprep.subr.mxu0 0.0
    %187 = vmatpush1.msra.mxu0 0.0
    %188 = vmatprep.subr.mxu0 0.0
    %189 = vmatpush1.msra.mxu0 0.0
    %190 = vmatprep.subr.mxu0 0.0
    %191 = vmatpush1.msra.mxu0 0.0
    %192 = vmatprep.subr.mxu0 0.0
    %193 = vmatpush1.msra.mxu0 0.0
    %194 = vmatprep.subr.mxu0 0.0
    %195 = vmatpush1.msra.mxu0 0.0
    %196 = vmatprep.subr.mxu0 0.0
    %197 = vmatpush1.msra.mxu0 0.0
    %198 = vmatprep.subr.mxu0 0.0
    %199 = vmatpush1.msra.mxu0 0.0
    %200 = vmatprep.subr.mxu0 0.0
    %201 = vmatpush1.msra.mxu0 0.0
    %202 = vmatprep.subr.mxu0 0.0
    %203 = vmatpush1.msra.mxu0 %v170
    %204 = vmatprep.subr.mxu0 0.0
    %205 = vmatpush1.msra.mxu0 %v169
    %206 = vmatprep.subr.mxu0 0.0
    %207 = vmatpush1.msra.mxu0 %v168
    %208 = vmatprep.subr.mxu0 0.0
    %209 = vmatpush1.msra.mxu0 %v167
    %210 = vmatprep.subr.mxu0 0.0
    %211 = vmatpush2.msra.mxu0 0.0
    %212 = vmatprep.subr.mxu0 0.0
    %213 = vmatpush2.msra.mxu0 0.0
    %214 = vmatprep.subr.mxu0 0.0
    %215 = vmatpush2.msra.mxu0 0.0
    %216 = vmatprep.subr.mxu0 0.0
    %217 = vmatpush2.msra.mxu0 0.0
    %218 = vmatprep.subr.mxu0 0.0
    %219 = vmatpush2.msra.mxu0 0.0
    %220 = vmatprep.subr.mxu0 0.0
    %221 = vmatpush2.msra.mxu0 0.0
    %222 = vmatprep.subr.mxu0 0.0
    %223 = vmatpush2.msra.mxu0 0.0
    %224 = vmatprep.subr.mxu0 0.0
    %225 = vmatpush2.msra.mxu0 0.0
    %226 = vmatprep.subr.mxu0 0.0
    %227 = vmatpush2.msra.mxu0 0.0
    %228 = vmatprep.subr.mxu0 0.0
    %229 = vmatpush2.msra.mxu0 0.0
    %230 = vmatprep.subr.mxu0 0.0
    %231 = vmatpush2.msra.mxu0 0.0
    %232 = vmatprep.subr.mxu0 0.0
    %233 = vmatpush2.msra.mxu0 0.0
    %234 = vmatprep.subr.mxu0 0.0
    %235 = vmatpush2.msra.mxu0 0.0
    %236 = vmatprep.subr.mxu0 0.0
    %237 = vmatpush2.msra.mxu0 0.0
    %238 = vmatprep.subr.mxu0 0.0
    %239 = vmatpush2.msra.mxu0 0.0
    %240 = vmatprep.subr.mxu0 0.0
    %241 = vmatpush2.msra.mxu0 0.0
    %242 = vmatprep.mubr.f32.mxu0 0.0
    %243 = vmatmul.mubr.f32.gmra.mxu0 %v173
    %v244 = vpop.f32.mrf.mxu0
    %v245 = vadd.f32 0.0, %v244
    %v246 = vpop.f32.mrf.mxu0
    %247 = vmatprep.mubr.f32.mxu0 0.0
    %248 = vmatmul.mubr.f32.gmra.mxu0 %v176
    %v249 = vpop.f32.mrf.mxu0
    %v250 = vadd.f32 0.0, %v249
    %v251 = vpop.f32.mrf.mxu0
    %252 = vdwg.mxu0
    %v253 = vmul.f32 %v157, %v245
    %v254 = vmul.f32 %v162, %v250
    %vm255 = vcmp.gt.f32.partialorder %v253, 0.0
    %vm256 = vcmp.gt.f32.partialorder %v254, 0.0
    %v257 = vmul.f32 %v253, 1.442695
    %v258 = vpow.pop %v257
    %v259 = vmul.f32 %v254, 1.442695
    %v260 = vpow.pop %v259
    %v261 = vsub.f32 %v258, 1.0
    %v262 = vsub.f32 %v260, 1.0
    %v263 = vsel %vm255, %v253, %v261
    %v264 = vsel %vm256, %v254, %v262
    %265 = vst [vmem:[#allocation10] sm:$0xff] %v263
    %266 = vst [vmem:[#allocation10 + $0x8] sm:$0xff] %v264
    // Predicated region
    $region34: #{tpu_custom_call.1} parent=1 // pred_check
      _
    $region35: #{tpu_custom_call.1} parent=1 // pred_check_branch
      %268 = sbr.rel (0) target = $region37
    $region36: #{tpu_custom_call.1} parent=1 // pred_region
      %s270 = ssub.s32 256, 256
      %271 = vsyncadd [#allocation4], %s270
      %s272 = sshll.u32 [#allocation10], 4
      %s273 = int_to_ptr.vmem [resolvable:$true] %s272
      %278 = dma.vmem_to_hbm [thread:$0]  %s273, 256, %s4, [#allocation4], 128, 128, 8
    $region37: #{tpu_custom_call.1} parent=1 // pred_fallthru
      _
    // Predicated region
    $region38: #{tpu_custom_call.1} parent=1 // pred_check
      _
    $region39: #{tpu_custom_call.1} parent=1 // pred_check_branch
      %280 = sbr.rel (0) target = $region41
    $region40: #{tpu_custom_call.1} parent=1 // pred_region
      %281 = dma.done [#allocation4], 256
    $region41: #{tpu_custom_call.1} parent=1 // pred_fallthru
      _
    %282 = vsyncpa [#allocation3], 1
    %283 = vsyncpa [#allocation6], 1
    %284 = vsyncpa [#allocation9], 1
    %285 = vsyncpa [#allocation4], 1

</llo_original>
